<compile_context>
chip_gen: v7x
topology: tpu7x:2x2x1
jax: 0.10.0
libtpu: 0.0.40
codegen_flags: <defaults>
</compile_context>

<pallas_src>
import functools
import math

import jax
import jax.numpy as jnp
from jax.experimental import pallas as pl
from jax.experimental.pallas import tpu as pltpu

_VMEM_LIMIT = 64 * 1024 * 1024  # above v5e/v6e scoped defaults, <= v7x physical


def _row_tile(n, target=512):
    """Largest row tile <= target that divides n and is a multiple of 8 (or n)."""
    if n <= target:
        return n
    for tm in range(target, 7, -8):
        if n % tm == 0:
            return tm
    return n  # fallback: whole slab (only for pathological n)


def _seq_tile(s, target=256):
    """Query-axis tile: largest multiple of 8 <= target dividing s (or s)."""
    if s <= target:
        return s
    for tq in range(target, 7, -8):
        if s % tq == 0:
            return tq
    return s


# ------------------------------------------------------------------
# Kernel 1: fused q / k / v linear projections, row-tiled
#   xq/xk/xv tiles: (tm, D) f32 ; wqkv: (D, 3D) bf16 resident ; biases (1, D) f32
#   outputs: q, k, v each (tm, D) bf16 (lane-dense direct stores, no concat)
# ------------------------------------------------------------------
def _qkv_proj_kernel(xq_ref, xk_ref, xv_ref, w_ref, bq_ref, bk_ref, bv_ref,
                     q_ref, k_ref, v_ref, *, d_model):
    D = d_model
    w = w_ref[...]                                   # (D, 3D) bf16 resident
    q = jnp.dot(xq_ref[...].astype(jnp.bfloat16), w[:, :D],
                preferred_element_type=jnp.float32)
    k = jnp.dot(xk_ref[...].astype(jnp.bfloat16), w[:, D:2 * D],
                preferred_element_type=jnp.float32)
    v = jnp.dot(xv_ref[...].astype(jnp.bfloat16), w[:, 2 * D:],
                preferred_element_type=jnp.float32)
    q_ref[...] = (q + bq_ref[...]).astype(q_ref.dtype)
    k_ref[...] = (k + bk_ref[...]).astype(k_ref.dtype)
    v_ref[...] = (v + bv_ref[...]).astype(v_ref.dtype)


def _qkv_proj_fused_kernel(x_ref, w_ref, bq_ref, bk_ref, bv_ref,
                           q_ref, k_ref, v_ref, *, d_model):
    # Fast path: q/k/v inputs are the same array -> one weight push, (tm,3D) output.
    D = d_model
    y = jnp.dot(x_ref[...].astype(jnp.bfloat16), w_ref[...],
                preferred_element_type=jnp.float32)        # (tm, 3D) f32
    q_ref[...] = (y[:, :D] + bq_ref[...]).astype(q_ref.dtype)
    k_ref[...] = (y[:, D:2 * D] + bk_ref[...]).astype(k_ref.dtype)
    v_ref[...] = (y[:, 2 * D:] + bv_ref[...]).astype(v_ref.dtype)


def qkv_projection(xq, xk, xv, wqkv, bq, bk, bv, *, fuse_single_input=False):
    N, D = xq.shape
    tm = _row_tile(N)
    act = pl.BlockSpec((tm, D), lambda i: (i, 0))
    const = lambda a: pl.BlockSpec(a.shape, lambda i: (0, 0))
    out_spec = pl.BlockSpec((tm, D), lambda i: (i, 0))
    out_shape = (jax.ShapeDtypeStruct((N, D), jnp.bfloat16),) * 3
    cp = pltpu.CompilerParams(dimension_semantics=("parallel",),
                              vmem_limit_bytes=_VMEM_LIMIT)
    if fuse_single_input:
        return pl.pallas_call(
            functools.partial(_qkv_proj_fused_kernel, d_model=D),
            grid=(N // tm,),
            in_specs=[act, const(wqkv), const(bq), const(bk), const(bv)],
            out_specs=(out_spec, out_spec, out_spec),
            out_shape=out_shape,
            compiler_params=cp,
        )(xq, wqkv, bq, bk, bv)
    return pl.pallas_call(
        functools.partial(_qkv_proj_kernel, d_model=D),
        grid=(N // tm,),
        in_specs=[act, act, act, const(wqkv), const(bq), const(bk), const(bv)],
        out_specs=(out_spec, out_spec, out_spec),
        out_shape=out_shape,
        compiler_params=cp,
    )(xq, xk, xv, wqkv, bq, bk, bv)


# ------------------------------------------------------------------
# Kernel 2: AKT monotonic attention core, grid = (batch, query-tile)
#   gamma_ref: (n_heads,) f32 in SMEM (scalar prefetch)
#   q_ref:     (tq, D) bf16  (query-row tile, heads packed on lanes)
#   k_ref/v_ref: (S, D) bf16 (full key/value for this batch, resident across tiles)
#   o_ref:     (tq, D) bf16  heads packed on lanes
#   acc_ref:   (tq, D) f32 VMEM scratch (per-head slabs -> one lane-dense store)
# ------------------------------------------------------------------
def _attn_kernel(gamma_ref, q_ref, k_ref, v_ref, o_ref, acc_ref, *,
                 n_heads, d_model, seq_len, q_tile, mask_k, zero_pad):
    D, S, tq = d_model, seq_len, q_tile
    dk = D // n_heads

    q = q_ref[...]                                   # (tq, D) bf16
    k = k_ref[...]                                   # (S, D) bf16
    v = v_ref[...]                                   # (S, D) bf16

    q0 = pl.program_id(1) * tq                       # global query-row offset
    row = jax.lax.broadcasted_iota(jnp.int32, (tq, S), 0) + q0   # query idx (x2)
    col = jax.lax.broadcasted_iota(jnp.int32, (tq, S), 1)        # key idx   (x1)
    allow = (col - row) < mask_k                     # nopeek_mask != 0
    allow_f = allow.astype(jnp.float32)
    pos_eff = jnp.abs(col - row).astype(jnp.float32)  # |x1 - x2|

    # Suffix-sum matrix for (disttotal - distcum) in one bf16 matmul:
    #   (s_ @ M)[i, j] = sum_{j' > j} s_[i, j']  with M[j', j] = (j' > j)
    krow = jax.lax.broadcasted_iota(jnp.int32, (S, S), 0)
    kcol = jax.lax.broadcasted_iota(jnp.int32, (S, S), 1)
    suffix_mat = (krow > kcol).astype(jnp.bfloat16)   # (S, S) bf16

    neg_inf = jnp.float32(-1e32)
    inv_sqrt_dk = jnp.float32(1.0 / math.sqrt(dk))

    def softmax(x):
        m = jnp.max(x, axis=-1, keepdims=True)
        e = jnp.exp(x - m)
        # approx reciprocal (EUP): ~2^-12 rel error, absorbed by tolerances.
        return e * pl.reciprocal(jnp.sum(e, axis=-1, keepdims=True), approx=True)

    # TODO(synk): per-head contractions are dk-wide; if the model config allows,
    # dk >= 128 would use the 256-wide v6e/v7x MXU much better.
    for h in range(n_heads):                          # static loop over heads
        qh = q[:, h * dk:(h + 1) * dk]
        kh = k[:, h * dk:(h + 1) * dk]
        vh = v[:, h * dk:(h + 1) * dk]

        # scores = q @ k^T / sqrt(d_k)  (bf16 MXU operands, f32 accumulation)
        scores = jax.lax.dot_general(
            qh, kh, (((1,), (1,)), ((), ())),
            preferred_element_type=jnp.float32) * inv_sqrt_dk        # (tq, S) f32

        # "torch.no_grad" distance statistics
        s_ = softmax(jnp.where(allow, scores, neg_inf)) * allow_f
        suffix = jnp.dot(s_.astype(jnp.bfloat16), suffix_mat,
                         preferred_element_type=jnp.float32)          # (tq, S) f32
        dist = jnp.sqrt(jnp.maximum(suffix * pos_eff, 0.0))

        gamma_h = gamma_ref[h]                        # SMEM scalar: -softplus(gamma)
        total_effect = jnp.clip(jnp.exp(dist * gamma_h), 1e-5, 1e5)

        att = softmax(jnp.where(allow, scores * total_effect, neg_inf))
        if zero_pad:
            att = jnp.where(row == 0, 0.0, att)       # zero global query row 0
        # dropout(scores) is identity in eval mode.
        acc_ref[:, h * dk:(h + 1) * dk] = jnp.dot(
            att.astype(jnp.bfloat16), vh, preferred_element_type=jnp.float32)

    # single lane-dense (tq, D) bf16 store, heads packed on lanes.
    o_ref[...] = acc_ref[...].astype(o_ref.dtype)


def attention_core(q, k, v, neg_gamma, *, n_heads, mask_k, zero_pad):
    bs, S, D = q.shape
    tq = _seq_tile(S)
    kern = functools.partial(_attn_kernel, n_heads=n_heads, d_model=D,
                             seq_len=S, q_tile=tq, mask_k=mask_k,
                             zero_pad=zero_pad)
    return pl.pallas_call(
        kern,
        grid_spec=pltpu.PrefetchScalarGridSpec(
            num_scalar_prefetch=1,                            # neg_gamma -> SMEM
            grid=(bs, S // tq),
            in_specs=[pl.BlockSpec((None, tq, D), lambda b, qi, g: (b, qi, 0)),
                      pl.BlockSpec((None, S, D), lambda b, qi, g: (b, 0, 0)),
                      pl.BlockSpec((None, S, D), lambda b, qi, g: (b, 0, 0))],
            out_specs=pl.BlockSpec((None, tq, D), lambda b, qi, g: (b, qi, 0)),
            scratch_shapes=[pltpu.VMEM((tq, D), jnp.float32)]),
        out_shape=jax.ShapeDtypeStruct((bs, S, D), jnp.bfloat16),
        compiler_params=pltpu.CompilerParams(
            dimension_semantics=("parallel", "parallel"),
            vmem_limit_bytes=_VMEM_LIMIT),
    )(neg_gamma, q, k, v)


# ------------------------------------------------------------------
# Kernel 3: out_proj + residual + LN1 + FFN (+ residual + LN2), row-tiled
# ------------------------------------------------------------------
def _post_attn_kernel(x_ref, a_ref, wo_ref, bo_ref, w1_ref, b1_ref,
                      w2_ref, b2_ref, ln1w_ref, ln1b_ref, ln2w_ref, ln2b_ref,
                      o_ref, *, apply_pos):
    def layer_norm(x, w, b):
        mu = jnp.mean(x, axis=-1, keepdims=True)
        var = jnp.mean(jnp.square(x - mu), axis=-1, keepdims=True)
        return (x - mu) * jax.lax.rsqrt(var + 1e-5) * w + b

    x = x_ref[...]                                            # residual (query), f32
    attn_out = jnp.dot(a_ref[...], wo_ref[...],               # bf16 x bf16 -> f32
                       preferred_element_type=jnp.float32) + bo_ref[...]
    h = layer_norm(x + attn_out, ln1w_ref[...], ln1b_ref[...])    # dropout1 == id
    if apply_pos:
        f = jnp.dot(h.astype(jnp.bfloat16), w1_ref[...],
                    preferred_element_type=jnp.float32) + b1_ref[...]
        f = jnp.maximum(f, 0.0)
        f = jnp.dot(f.astype(jnp.bfloat16), w2_ref[...],
                    preferred_element_type=jnp.float32) + b2_ref[...]
        o_ref[...] = layer_norm(h + f, ln2w_ref[...], ln2b_ref[...])  # dropout2 == id
    else:
        o_ref[...] = h


def post_attention(x, concat, prep, *, apply_pos=True):
    N, D = x.shape
    tm = _row_tile(N)
    args = (x, concat,
            prep["wo"], prep["bo"], prep["w1"], prep["b1"],
            prep["w2"], prep["b2"],
            prep["ln1w"], prep["ln1b"], prep["ln2w"], prep["ln2b"])
    act = pl.BlockSpec((tm, D), lambda i: (i, 0))
    const = lambda a: pl.BlockSpec(a.shape, lambda i: (0, 0))
    in_specs = [act, act] + [const(a) for a in args[2:]]
    return pl.pallas_call(
        functools.partial(_post_attn_kernel, apply_pos=apply_pos),
        grid=(N // tm,),
        in_specs=in_specs,
        out_specs=pl.BlockSpec((tm, D), lambda i: (i, 0)),
        out_shape=jax.ShapeDtypeStruct((N, D), jnp.float32),
        compiler_params=pltpu.CompilerParams(dimension_semantics=("parallel",),
                                             vmem_limit_bytes=_VMEM_LIMIT),
    )(*args)


# ------------------------------------------------------------------
# One-time parameter preparation (weight concat + bf16 cast hoisted out of
# the forward path) and the TransformerLayer forward (thin glue: reshapes only).
# ------------------------------------------------------------------
def prepare_params(p):
    bf16 = jnp.bfloat16
    nh = p["n_heads"]
    return {
        "n_heads": nh,
        "wqkv": jnp.concatenate([p["wq"], p["wk"], p["wv"]], axis=1).astype(bf16),
        "bq": p["bq"], "bk": p["bk"], "bv": p["bv"],
        "wo": p["wo"].astype(bf16), "bo": p["bo"],
        "w1": p["w1"].astype(bf16), "b1": p["b1"],
        "w2": p["w2"].astype(bf16), "b2": p["b2"],
        "ln1w": p["ln1w"], "ln1b": p["ln1b"],
        "ln2w": p["ln2w"], "ln2b": p["ln2b"],
        # gamma = -softplus(gammas): tiny transform, done once here.
        "neg_gamma": (-jax.nn.softplus(p["gammas"])).reshape(nh).astype(jnp.float32),
    }


def transformer_layer_forward(prep, mask, query, key_, values, apply_pos=True):
    bs, S, D = query.shape
    nh = prep["n_heads"]
    N = bs * S

    same_qkv = (query is key_) and (key_ is values)
    q, k, v = qkv_projection(query.reshape(N, D), key_.reshape(N, D),
                             values.reshape(N, D), prep["wqkv"],
                             prep["bq"], prep["bk"], prep["bv"],
                             fuse_single_input=same_qkv)          # (N, D) bf16 each

    attn = attention_core(q.reshape(bs, S, D), k.reshape(bs, S, D),
                          v.reshape(bs, S, D), prep["neg_gamma"],
                          n_heads=nh, mask_k=int(mask), zero_pad=(mask == 0))

    out = post_attention(query.reshape(N, D), attn.reshape(N, D), prep,
                         apply_pos=apply_pos)
    return out.reshape(bs, S, D)


# ------------------------------------------------------------------
# Deterministic parameter init (shapes from the module's __init__)
# ------------------------------------------------------------------
def init_params(key, d_model, d_ff, n_heads):
    ks = jax.random.split(key, 8)

    def xavier(k, fan_in, fan_out, shape):
        b = math.sqrt(6.0 / (fan_in + fan_out))
        return jax.random.uniform(k, shape, jnp.float32, -b, b)

    D, F = d_model, d_ff
    return {
        "n_heads": n_heads,
        # linear weights stored already transposed: (in, out)
        "wq": xavier(ks[0], D, D, (D, D)), "bq": jnp.zeros((1, D), jnp.float32),
        "wk": xavier(ks[1], D, D, (D, D)), "bk": jnp.zeros((1, D), jnp.float32),
        "wv": xavier(ks[2], D, D, (D, D)), "bv": jnp.zeros((1, D), jnp.float32),
        "wo": xavier(ks[3], D, D, (D, D)), "bo": jnp.zeros((1, D), jnp.float32),
        "w1": xavier(ks[4], D, F, (D, F)),
        "b1": 0.01 * jax.random.normal(ks[5], (1, F), jnp.float32),
        "w2": xavier(ks[6], F, D, (F, D)),
        "b2": jnp.zeros((1, D), jnp.float32),
        "ln1w": jnp.ones((1, D), jnp.float32), "ln1b": jnp.zeros((1, D), jnp.float32),
        "ln2w": jnp.ones((1, D), jnp.float32), "ln2b": jnp.zeros((1, D), jnp.float32),
        "gammas": 0.5 * jax.random.normal(ks[7], (n_heads, 1, 1), jnp.float32),
    }


# ------------------------------------------------------------------
# Pure-JAX reference (mirror of the PyTorch forward).
# matmul_dtype=jnp.bfloat16 mirrors the kernels' MXU operand precision
# (f32 accumulation, f32 softmax/LN); matmul_dtype=jnp.float32 is the exact
# module-semantics reference.
# ------------------------------------------------------------------
def reference_forward(p, mask, query, key_, values, apply_pos=True,
                      matmul_dtype=jnp.float32):
    bs, S, D = query.shape
    nh = p["n_heads"]
    dk = D // nh

    def mm(a, b):
        return jnp.matmul(a.astype(matmul_dtype), b.astype(matmul_dtype),
                          preferred_element_type=jnp.float32)

    q = (mm(query, p["wq"]) + p["bq"]).reshape(bs, S, nh, dk).transpose(0, 2, 1, 3)
    k = (mm(key_, p["wk"]) + p["bk"]).reshape(bs, S, nh, dk).transpose(0, 2, 1, 3)
    v = (mm(values, p["wv"]) + p["bv"]).reshape(bs, S, nh, dk).transpose(0, 2, 1, 3)

    scores = jnp.einsum("bhqd,bhkd->bhqk", q.astype(matmul_dtype),
                        k.astype(matmul_dtype),
                        preferred_element_type=jnp.float32) / math.sqrt(dk)
    i = jnp.arange(S)[:, None]
    j = jnp.arange(S)[None, :]
    allow = (j - i) < mask
    s_ = jax.nn.softmax(jnp.where(allow, scores, -1e32), axis=-1) * allow
    distcum = jnp.cumsum(s_, axis=-1)
    disttotal = jnp.sum(s_, axis=-1, keepdims=True)
    pos = jnp.abs(j - i).astype(jnp.float32)
    dist = jnp.sqrt(jnp.maximum((disttotal - distcum) * pos, 0.0))
    gam = (-jax.nn.softplus(p["gammas"])).reshape(1, nh, 1, 1)
    te = jnp.clip(jnp.exp(dist * gam), 1e-5, 1e5)
    att = jax.nn.softmax(jnp.where(allow, scores * te, -1e32), axis=-1)
    if mask == 0:
        att = att.at[:, :, 0, :].set(0.0)
    out = jnp.einsum("bhqk,bhkd->bhqd", att.astype(matmul_dtype),
                     v.astype(matmul_dtype), preferred_element_type=jnp.float32)
    concat = out.transpose(0, 2, 1, 3).reshape(bs, S, D)
    attn_out = mm(concat, p["wo"]) + p["bo"]

    def ln(x, w, b):
        mu = x.mean(-1, keepdims=True)
        var = ((x - mu) ** 2).mean(-1, keepdims=True)
        return (x - mu) / jnp.sqrt(var + 1e-5) * w + b

    x = ln(query + attn_out, p["ln1w"], p["ln1b"])
    if apply_pos:
        f = jnp.maximum(mm(x, p["w1"]) + p["b1"], 0.0)
        f = mm(f, p["w2"]) + p["b2"]
        x = ln(x + f, p["ln2w"], p["ln2b"])
    return x


if __name__ == "__main__":
    root = jax.random.PRNGKey(0)
    kp, kq, kk, kv = jax.random.split(root, 4)

    bs, S, d_model, n_heads, d_ff = 2, 8, 32, 4, 64
    params = init_params(kp, d_model, d_ff, n_heads)
    prep = prepare_params(params)          # one-time weight concat / bf16 cast

    query = jax.random.normal(kq, (bs, S, d_model), jnp.float32)
    key_in = jax.random.normal(kk, (bs, S, d_model), jnp.float32)
    values = jax.random.normal(kv, (bs, S, d_model), jnp.float32)

    # --- mask=0: strictly-causal nopeek mask and zero_pad=True (as in the module)
    mask = 0
    out = transformer_layer_forward(prep, mask, query, key_in, values, apply_pos=True)
    out = jax.block_until_ready(out)

    ref_mirror = reference_forward(params, mask, query, key_in, values, True,
                                   matmul_dtype=jnp.bfloat16)   # same MXU precision
    ref_f32 = reference_forward(params, mask, query, key_in, values, True,
                                matmul_dtype=jnp.float32)       # module-exact f32

    assert out.shape == (bs, S, d_model)
    assert bool(jnp.all(jnp.isfinite(out)))
    assert bool(jnp.allclose(out, ref_mirror, atol=2e-2, rtol=2e-2)), \
        "mismatch vs bf16-matmul reference (mask=0)"
    assert bool(jnp.allclose(out, ref_f32, atol=8e-2, rtol=8e-2)), \
        "mismatch vs f32 reference (mask=0)"

    # --- mask=1, q=k=v aliased: exercises the fused single-dot projection path
    out2 = transformer_layer_forward(prep, 1, query, query, query, apply_pos=True)
    out2 = jax.block_until_ready(out2)
    ref2 = reference_forward(params, 1, query, query, query, True,
                             matmul_dtype=jnp.float32)
    assert bool(jnp.all(jnp.isfinite(out2)))
    assert bool(jnp.allclose(out2, ref2, atol=8e-2, rtol=8e-2)), \
        "mismatch vs f32 reference (mask=1, fused qkv path)"

    print("KERNEL_OK")
</pallas_src>

<mosaic_0001>
module attributes {stable_mosaic.version = 11 : i64} {
  func.func @_qkv_proj_kernel(%arg0: i32, %arg1: memref<16x32xf32, #tpu.memory_space<vmem>>, %arg2: memref<16x32xf32, #tpu.memory_space<vmem>>, %arg3: memref<16x32xf32, #tpu.memory_space<vmem>>, %arg4: memref<32x96xbf16, #tpu.memory_space<vmem>>, %arg5: memref<1x32xf32, #tpu.memory_space<vmem>>, %arg6: memref<1x32xf32, #tpu.memory_space<vmem>>, %arg7: memref<1x32xf32, #tpu.memory_space<vmem>>, %arg8: memref<16x32xbf16, #tpu.memory_space<vmem>>, %arg9: memref<16x32xbf16, #tpu.memory_space<vmem>>, %arg10: memref<16x32xbf16, #tpu.memory_space<vmem>>) attributes {dimension_semantics = [#tpu.dimension_semantics<parallel>], iteration_bounds = array<i64: 1>, scalar_prefetch = 0 : i64, scratch_operands = 0 : i64, tpu.core_type = #tpu.core_type<tc>, window_params = [{transform_indices = @transform_0, window_bounds = array<i64: 16, 32>}, {transform_indices = @transform_1, window_bounds = array<i64: 16, 32>}, {transform_indices = @transform_2, window_bounds = array<i64: 16, 32>}, {pipeline_mode = #tpu.pipeline_mode<synchronous>, transform_indices = @transform_3, window_bounds = array<i64: 32, 96>}, {pipeline_mode = #tpu.pipeline_mode<synchronous>, transform_indices = @transform_4, window_bounds = array<i64: 1, 32>}, {pipeline_mode = #tpu.pipeline_mode<synchronous>, transform_indices = @transform_5, window_bounds = array<i64: 1, 32>}, {pipeline_mode = #tpu.pipeline_mode<synchronous>, transform_indices = @transform_6, window_bounds = array<i64: 1, 32>}, {transform_indices = @transform_7, window_bounds = array<i64: 16, 32>}, {transform_indices = @transform_8, window_bounds = array<i64: 16, 32>}, {transform_indices = @transform_9, window_bounds = array<i64: 16, 32>}]} {
    %c0 = arith.constant 0 : index
    %c0_0 = arith.constant 0 : index
    %0 = vector.load %arg4[%c0, %c0_0] : memref<32x96xbf16, #tpu.memory_space<vmem>>, vector<32x96xbf16>
    %c0_1 = arith.constant 0 : index
    %c0_2 = arith.constant 0 : index
    %1 = vector.load %arg1[%c0_1, %c0_2] : memref<16x32xf32, #tpu.memory_space<vmem>>, vector<16x32xf32>
    %2 = arith.truncf %1 : vector<16x32xf32> to vector<16x32xbf16>
    %3 = vector.extract_strided_slice %0 {offsets = [0, 0], sizes = [32, 32], strides = [1, 1]} : vector<32x96xbf16> to vector<32x32xbf16>
    %cst = arith.constant dense<0.000000e+00> : vector<16x32xf32>
    %4 = tpu.matmul %2, %3, %cst {dimension_numbers = #tpu.dot_dimension_numbers<[1], [0], [0], [1], [0, 0, 1, 1], [], []>} : vector<16x32xbf16>, vector<32x32xbf16>, vector<16x32xf32> -> vector<16x32xf32>
    %c0_3 = arith.constant 0 : index
    %c0_4 = arith.constant 0 : index
    %5 = vector.load %arg2[%c0_3, %c0_4] : memref<16x32xf32, #tpu.memory_space<vmem>>, vector<16x32xf32>
    %6 = arith.truncf %5 : vector<16x32xf32> to vector<16x32xbf16>
    %7 = vector.extract_strided_slice %0 {offsets = [0, 32], sizes = [32, 32], strides = [1, 1]} : vector<32x96xbf16> to vector<32x32xbf16>
    %cst_5 = arith.constant dense<0.000000e+00> : vector<16x32xf32>
    %8 = tpu.matmul %6, %7, %cst_5 {dimension_numbers = #tpu.dot_dimension_numbers<[1], [0], [0], [1], [0, 0, 1, 1], [], []>} : vector<16x32xbf16>, vector<32x32xbf16>, vector<16x32xf32> -> vector<16x32xf32>
    %c0_6 = arith.constant 0 : index
    %c0_7 = arith.constant 0 : index
    %9 = vector.load %arg3[%c0_6, %c0_7] : memref<16x32xf32, #tpu.memory_space<vmem>>, vector<16x32xf32>
    %10 = arith.truncf %9 : vector<16x32xf32> to vector<16x32xbf16>
    %11 = vector.extract_strided_slice %0 {offsets = [0, 64], sizes = [32, 32], strides = [1, 1]} : vector<32x96xbf16> to vector<32x32xbf16>
    %cst_8 = arith.constant dense<0.000000e+00> : vector<16x32xf32>
    %12 = tpu.matmul %10, %11, %cst_8 {dimension_numbers = #tpu.dot_dimension_numbers<[1], [0], [0], [1], [0, 0, 1, 1], [], []>} : vector<16x32xbf16>, vector<32x32xbf16>, vector<16x32xf32> -> vector<16x32xf32>
    %c0_9 = arith.constant 0 : index
    %c0_10 = arith.constant 0 : index
    %13 = vector.load %arg5[%c0_9, %c0_10] : memref<1x32xf32, #tpu.memory_space<vmem>>, vector<1x32xf32>
    %14 = vector.broadcast %13 : vector<1x32xf32> to vector<16x32xf32>
    %15 = arith.addf %4, %14 : vector<16x32xf32>
    %16 = arith.truncf %15 : vector<16x32xf32> to vector<16x32xbf16>
    %c0_11 = arith.constant 0 : index
    %c0_12 = arith.constant 0 : index
    %17 = vector.load %arg8[%c0_11, %c0_12] : memref<16x32xbf16, #tpu.memory_space<vmem>>, vector<16x32xbf16>
    tpu.vector_store %arg8[%c0_11, %c0_12], %16 {strides = array<i32>} : memref<16x32xbf16, #tpu.memory_space<vmem>>, vector<16x32xbf16>,
    %c0_13 = arith.constant 0 : index
    %c0_14 = arith.constant 0 : index
    %18 = vector.load %arg6[%c0_13, %c0_14] : memref<1x32xf32, #tpu.memory_space<vmem>>, vector<1x32xf32>
    %19 = vector.broadcast %18 : vector<1x32xf32> to vector<16x32xf32>
    %20 = arith.addf %8, %19 : vector<16x32xf32>
    %21 = arith.truncf %20 : vector<16x32xf32> to vector<16x32xbf16>
    %c0_15 = arith.constant 0 : index
    %c0_16 = arith.constant 0 : index
    %22 = vector.load %arg9[%c0_15, %c0_16] : memref<16x32xbf16, #tpu.memory_space<vmem>>, vector<16x32xbf16>
    tpu.vector_store %arg9[%c0_15, %c0_16], %21 {strides = array<i32>} : memref<16x32xbf16, #tpu.memory_space<vmem>>, vector<16x32xbf16>,
    %c0_17 = arith.constant 0 : index
    %c0_18 = arith.constant 0 : index
    %23 = vector.load %arg7[%c0_17, %c0_18] : memref<1x32xf32, #tpu.memory_space<vmem>>, vector<1x32xf32>
    %24 = vector.broadcast %23 : vector<1x32xf32> to vector<16x32xf32>
    %25 = arith.addf %12, %24 : vector<16x32xf32>
    %26 = arith.truncf %25 : vector<16x32xf32> to vector<16x32xbf16>
    %c0_19 = arith.constant 0 : index
    %c0_20 = arith.constant 0 : index
    %27 = vector.load %arg10[%c0_19, %c0_20] : memref<16x32xbf16, #tpu.memory_space<vmem>>, vector<16x32xbf16>
    tpu.vector_store %arg10[%c0_19, %c0_20], %26 {strides = array<i32>} : memref<16x32xbf16, #tpu.memory_space<vmem>>, vector<16x32xbf16>,
    return
  }
  func.func @transform_0(%arg0: i32) -> (i32, i32) {
    %c0_i32 = arith.constant 0 : i32
    %c0_i32_0 = arith.constant 0 : i32
    return %arg0, %c0_i32 : i32, i32
  }
  func.func @transform_1(%arg0: i32) -> (i32, i32) {
    %c0_i32 = arith.constant 0 : i32
    %c0_i32_0 = arith.constant 0 : i32
    return %arg0, %c0_i32 : i32, i32
  }
  func.func @transform_2(%arg0: i32) -> (i32, i32) {
    %c0_i32 = arith.constant 0 : i32
    %c0_i32_0 = arith.constant 0 : i32
    return %arg0, %c0_i32 : i32, i32
  }
  func.func @transform_3(%arg0: i32) -> (i32, i32) {
    %c0_i32 = arith.constant 0 : i32
    %c0_i32_0 = arith.constant 0 : i32
    %c0_i32_1 = arith.constant 0 : i32
    return %c0_i32, %c0_i32_0 : i32, i32
  }
  func.func @transform_4(%arg0: i32) -> (i32, i32) {
    %c0_i32 = arith.constant 0 : i32
    %c0_i32_0 = arith.constant 0 : i32
    %c0_i32_1 = arith.constant 0 : i32
    return %c0_i32, %c0_i32_0 : i32, i32
  }
  func.func @transform_5(%arg0: i32) -> (i32, i32) {
    %c0_i32 = arith.constant 0 : i32
    %c0_i32_0 = arith.constant 0 : i32
    %c0_i32_1 = arith.constant 0 : i32
    return %c0_i32, %c0_i32_0 : i32, i32
  }
  func.func @transform_6(%arg0: i32) -> (i32, i32) {
    %c0_i32 = arith.constant 0 : i32
    %c0_i32_0 = arith.constant 0 : i32
    %c0_i32_1 = arith.constant 0 : i32
    return %c0_i32, %c0_i32_0 : i32, i32
  }
  func.func @transform_7(%arg0: i32) -> (i32, i32) {
    %c0_i32 = arith.constant 0 : i32
    %c0_i32_0 = arith.constant 0 : i32
    return %arg0, %c0_i32 : i32, i32
  }
  func.func @transform_8(%arg0: i32) -> (i32, i32) {
    %c0_i32 = arith.constant 0 : i32
    %c0_i32_0 = arith.constant 0 : i32
    return %arg0, %c0_i32 : i32, i32
  }
  func.func @transform_9(%arg0: i32) -> (i32, i32) {
    %c0_i32 = arith.constant 0 : i32
    %c0_i32_0 = arith.constant 0 : i32
    return %arg0, %c0_i32 : i32, i32
  }
}

</mosaic_0001>

<llo_original>
// kernel: tpu_custom_call.1
$region0: #{tpu_custom_call.1}
  #allocation0 [shape = 'u32[]', space=smem, size = 0x4, offset = 0x4, fixed_abs, tag = 'smem constant byte address 0x4 - core index']
  #allocation1 [shape = 'u32[144,128]{1,0:T(1,128)}', space=vmem, size = 0x12000, scoped, tag = 'internal scratch']
  %s0 = inlined_call_operand.hbm [shape: f32[16,32], index: 0, kind: input, shape index: {}]
  %s1 = inlined_call_operand.hbm [shape: f32[16,32], index: 1, kind: input, shape index: {}]
  %s2 = inlined_call_operand.hbm [shape: f32[16,32], index: 2, kind: input, shape index: {}]
  %s3 = inlined_call_operand.hbm [shape: bf16[32,96], index: 3, kind: input, shape index: {}]
  %s4 = inlined_call_operand.hbm [shape: f32[1,32], index: 4, kind: input, shape index: {}]
  %s5 = inlined_call_operand.hbm [shape: f32[1,32], index: 5, kind: input, shape index: {}]
  %s6 = inlined_call_operand.hbm [shape: f32[1,32], index: 6, kind: input, shape index: {}]
  %s7 = inlined_call_operand.hbm [shape: bf16[16,32], index: 7, kind: output, shape index: {0}]
  %s8 = inlined_call_operand.hbm [shape: bf16[16,32], index: 8, kind: output, shape index: {1}]
  %s9 = inlined_call_operand.hbm [shape: bf16[16,32], index: 9, kind: output, shape index: {2}]
  %10 = xla_tuple %s7, %s8, %s9
  %s11 = sld [smem:[#allocation0]]
  $region82: #{tpu_custom_call.1} parent=0
    _
  %s13 = ssub.s32 1, %s11
  %s14 = scalar_select 0, %s13, %s11
  $region1: #{tpu_custom_call.1} parent=0
    #allocation2 [shape = 'u8[8192]{0}', space=vmem, size = 0x2000, scoped, tag = 'input window, operand 0, single buffered']
    #allocation3 [shape = 's32[1]{0}', space=sflag, size = 0x4, scoped, tag = 'scoped memory for tpu_custom_call.1']
    #allocation4 [shape = 's32[1]{0}', space=sflag, size = 0x4, scoped, tag = 'scoped memory for tpu_custom_call.1']
    #allocation5 [shape = 'u8[8192]{0}', space=vmem, size = 0x2000, scoped, tag = 'input window, operand 1, single buffered']
    #allocation6 [shape = 's32[1]{0}', space=sflag, size = 0x4, scoped, tag = 'scoped memory for tpu_custom_call.1']
    #allocation7 [shape = 'u8[8192]{0}', space=vmem, size = 0x2000, scoped, tag = 'input window, operand 2, single buffered']
    #allocation8 [shape = 'u8[8192]{0}', space=vmem, size = 0x2000, scoped, tag = 'input window, operand 3, single buffered']
    #allocation9 [shape = 's32[1]{0}', space=sflag, size = 0x4, scoped, tag = 'scoped memory for tpu_custom_call.1']
    #allocation10 [shape = 'u8[512]{0}', space=vmem, size = 0x400, scoped, tag = 'input window, operand 4, single buffered']
    #allocation11 [shape = 'u8[512]{0}', space=vmem, size = 0x400, scoped, tag = 'input window, operand 5, single buffered']
    #allocation12 [shape = 's32[1]{0}', space=sflag, size = 0x4, scoped, tag = 'scoped memory for tpu_custom_call.1']
    #allocation13 [shape = 'u8[512]{0}', space=vmem, size = 0x400, scoped, tag = 'input window, operand 6, single buffered']
    #allocation14 [shape = 'u8[4096]{0}', space=vmem, size = 0x1000, scoped, tag = 'output window, operand 0, single buffered']
    #allocation15 [shape = 'u8[4096]{0}', space=vmem, size = 0x1000, scoped, tag = 'output window, operand 1, single buffered']
    #allocation16 [shape = 's32[1]{0}', space=sflag, size = 0x4, scoped, tag = 'scoped memory for tpu_custom_call.1']
    #allocation17 [shape = 'u8[4096]{0}', space=vmem, size = 0x1000, scoped, tag = 'output window, operand 2, single buffered']
    %15 = vsyncpa [#allocation3], 0
    %16 = vsyncpa [#allocation6], 0
    %17 = vsyncpa [#allocation9], 0
    %18 = vsyncpa [#allocation12], 0
    %19 = vsyncpa [#allocation4], 0
    %20 = vsyncpa [#allocation16], 0
    // Predicated region
    $region2: #{tpu_custom_call.1} parent=1 // pred_check
      _
    $region3: #{tpu_custom_call.1} parent=1 // pred_check_branch
      %22 = sbr.rel (0) target = $region5
    $region4: #{tpu_custom_call.1} parent=1 // pred_region
      %s24 = ssub.s32 256, 256
      %25 = vsyncadd [#allocation3], %s24
      %s26 = sshll.u32 [#allocation2], 4
      %s27 = int_to_ptr.vmem [resolvable:$true] %s26
      %32 = dma.hbm_to_vmem [thread:$0]  %s0, 256, %s27, [#allocation3], 128, 128, 8
    $region5: #{tpu_custom_call.1} parent=1 // pred_fallthru
      _
    // Predicated region
    $region6: #{tpu_custom_call.1} parent=1 // pred_check
      _
    $region7: #{tpu_custom_call.1} parent=1 // pred_check_branch
      %34 = sbr.rel (0) target = $region9
    $region8: #{tpu_custom_call.1} parent=1 // pred_region
      %s36 = ssub.s32 256, 256
      %37 = vsyncadd [#allocation6], %s36
      %s38 = sshll.u32 [#allocation5], 4
      %s39 = int_to_ptr.vmem [resolvable:$true] %s38
      %44 = dma.hbm_to_vmem [thread:$0]  %s1, 256, %s39, [#allocation6], 128, 128, 8
    $region9: #{tpu_custom_call.1} parent=1 // pred_fallthru
      _
    // Predicated region
    $region10: #{tpu_custom_call.1} parent=1 // pred_check
      _
    $region11: #{tpu_custom_call.1} parent=1 // pred_check_branch
      %46 = sbr.rel (0) target = $region13
    $region12: #{tpu_custom_call.1} parent=1 // pred_region
      %s48 = ssub.s32 256, 256
      %49 = vsyncadd [#allocation6], %s48
      %s50 = sshll.u32 [#allocation7], 4
      %s51 = int_to_ptr.vmem [resolvable:$true] %s50
      %56 = dma.hbm_to_vmem [thread:$0]  %s2, 256, %s51, [#allocation6], 128, 128, 8
    $region13: #{tpu_custom_call.1} parent=1 // pred_fallthru
      _
    // Predicated region
    $region14: #{tpu_custom_call.1} parent=1 // pred_check
      _
    $region15: #{tpu_custom_call.1} parent=1 // pred_check_branch
      %58 = sbr.rel (0) target = $region17
    $region16: #{tpu_custom_call.1} parent=1 // pred_region
      %s60 = ssub.s32 256, 256
      %61 = vsyncadd [#allocation9], %s60
      %s62 = sshll.u32 [#allocation8], 4
      %s63 = int_to_ptr.vmem [resolvable:$true] %s62
      %68 = dma.hbm_to_vmem [thread:$0]  %s3, 256, %s63, [#allocation9], 64, 64, 4
    $region17: #{tpu_custom_call.1} parent=1 // pred_fallthru
      _
    // Predicated region
    $region18: #{tpu_custom_call.1} parent=1 // pred_check
      _
    $region19: #{tpu_custom_call.1} parent=1 // pred_check_branch
      %70 = sbr.rel (0) target = $region21
    $region20: #{tpu_custom_call.1} parent=1 // pred_region
      %s72 = ssub.s32 16, 16
      %73 = vsyncadd [#allocation9], %s72
      %s75 = sshll.u32 [#allocation10], 4
      %s76 = int_to_ptr.vmem [resolvable:$true] %s75
      %78 = dma.hbm_to_vmem [thread:$0]  %s4, 16, %s76, [#allocation9]
    $region21: #{tpu_custom_call.1} parent=1 // pred_fallthru
      _
    // Predicated region
    $region22: #{tpu_custom_call.1} parent=1 // pred_check
      _
    $region23: #{tpu_custom_call.1} parent=1 // pred_check_branch
      %80 = sbr.rel (0) target = $region25
    $region24: #{tpu_custom_call.1} parent=1 // pred_region
      %s82 = ssub.s32 16, 16
      %83 = vsyncadd [#allocation12], %s82
      %s85 = sshll.u32 [#allocation11], 4
      %s86 = int_to_ptr.vmem [resolvable:$true] %s85
      %88 = dma.hbm_to_vmem [thread:$0]  %s5, 16, %s86, [#allocation12]
    $region25: #{tpu_custom_call.1} parent=1 // pred_fallthru
      _
    // Predicated region
    $region26: #{tpu_custom_call.1} parent=1 // pred_check
      _
    $region27: #{tpu_custom_call.1} parent=1 // pred_check_branch
      %90 = sbr.rel (0) target = $region29
    $region28: #{tpu_custom_call.1} parent=1 // pred_region
      %s92 = ssub.s32 16, 16
      %93 = vsyncadd [#allocation12], %s92
      %s95 = sshll.u32 [#allocation13], 4
      %s96 = int_to_ptr.vmem [resolvable:$true] %s95
      %98 = dma.hbm_to_vmem [thread:$0]  %s6, 16, %s96, [#allocation12]
    $region29: #{tpu_custom_call.1} parent=1 // pred_fallthru
      _
    // Predicated region
    $region30: #{tpu_custom_call.1} parent=1 // pred_check
      _
    $region31: #{tpu_custom_call.1} parent=1 // pred_check_branch
      %100 = sbr.rel (0) target = $region33
    $region32: #{tpu_custom_call.1} parent=1 // pred_region
      %101 = dma.done [#allocation3], 256
    $region33: #{tpu_custom_call.1} parent=1 // pred_fallthru
      _
    // Predicated region
    $region34: #{tpu_custom_call.1} parent=1 // pred_check
      _
    $region35: #{tpu_custom_call.1} parent=1 // pred_check_branch
      %103 = sbr.rel (0) target = $region37
    $region36: #{tpu_custom_call.1} parent=1 // pred_region
      %104 = dma.done [#allocation6], 256
    $region37: #{tpu_custom_call.1} parent=1 // pred_fallthru
      _
    // Predicated region
    $region38: #{tpu_custom_call.1} parent=1 // pred_check
      _
    $region39: #{tpu_custom_call.1} parent=1 // pred_check_branch
      %106 = sbr.rel (0) target = $region41
    $region40: #{tpu_custom_call.1} parent=1 // pred_region
      %107 = dma.done [#allocation6], 256
    $region41: #{tpu_custom_call.1} parent=1 // pred_fallthru
      _
    // Predicated region
    $region42: #{tpu_custom_call.1} parent=1 // pred_check
      _
    $region43: #{tpu_custom_call.1} parent=1 // pred_check_branch
      %109 = sbr.rel (0) target = $region45
    $region44: #{tpu_custom_call.1} parent=1 // pred_region
      %110 = dma.done [#allocation9], 256
    $region45: #{tpu_custom_call.1} parent=1 // pred_fallthru
      _
    // Predicated region
    $region46: #{tpu_custom_call.1} parent=1 // pred_check
      _
    $region47: #{tpu_custom_call.1} parent=1 // pred_check_branch
      %112 = sbr.rel (0) target = $region49
    $region48: #{tpu_custom_call.1} parent=1 // pred_region
      %113 = dma.done [#allocation9], 16
    $region49: #{tpu_custom_call.1} parent=1 // pred_fallthru
      _
    // Predicated region
    $region50: #{tpu_custom_call.1} parent=1 // pred_check
      _
    $region51: #{tpu_custom_call.1} parent=1 // pred_check_branch
      %115 = sbr.rel (0) target = $region53
    $region52: #{tpu_custom_call.1} parent=1 // pred_region
      %116 = dma.done [#allocation12], 16
    $region53: #{tpu_custom_call.1} parent=1 // pred_fallthru
      _
    // Predicated region
    $region54: #{tpu_custom_call.1} parent=1 // pred_check
      _
    $region55: #{tpu_custom_call.1} parent=1 // pred_check_branch
      %118 = sbr.rel (0) target = $region57
    $region56: #{tpu_custom_call.1} parent=1 // pred_region
      %119 = dma.done [#allocation12], 16
    $region57: #{tpu_custom_call.1} parent=1 // pred_fallthru
      _
    %v121 = vld [vmem:[#allocation8] sm:$0xf]
    %v122 = vld [vmem:[#allocation8 + $0x4] sm:$0xf]
    %v123 = vld [vmem:[#allocation8 + $0x8] sm:$0xf]
    %v124 = vld [vmem:[#allocation8 + $0xc] sm:$0xf]
    %v125 = vld [vmem:[#allocation2] sm:$0xff]
    %v126 = vld [vmem:[#allocation2 + $0x8] sm:$0xff]
    %v127 = vpack.c.bf16 %v126, %v125
    %v128 = vld [vmem:[#allocation5] sm:$0xff]
    %v129 = vld [vmem:[#allocation5 + $0x8] sm:$0xff]
    %v130 = vpack.c.bf16 %v129, %v128
    %v131 = vld [vmem:[#allocation7] sm:$0xff]
    %v132 = vld [vmem:[#allocation7 + $0x8] sm:$0xff]
    %v133 = vpack.c.bf16 %v132, %v131
    %v134 = vld [vmem:[#allocation10] sm:$0x1]
    %v136 = vlaneseq
    %v137 = vshrl.u32 %v136, 7
    %v138 = vsub.s32 0, %v137
    %v139 = vrot.slane %v134, %v138
    %v145 = vunpack.c.l.b16 %v121
    %v146 = vunpack.c.l.b16 %v122
    %v147 = vunpack.c.l.b16 %v123
    %v148 = vunpack.c.l.b16 %v124
    %v149 = vpack.c.b16 %v146, %v145
    %v150 = vpack.c.b16 %v148, %v147
    %vm153 = vcmask 261120
    %v155 = vsel %vm153, %v127, 0
    %157 = vmatprep.subr.bf16.mxu0 0
    %158 = vmatpush1.bf16.msra.mxu0 %v149
    %159 = vmatprep.subr.bf16.mxu0 0
    %160 = vmatpush1.bf16.msra.mxu0 %v150
    %161 = vmatprep.subr.bf16.mxu0 0
    %162 = vmatpush1.bf16.msra.mxu0 0
    %163 = vmatprep.subr.bf16.mxu0 0
    %164 = vmatpush1.bf16.msra.mxu0 0
    %165 = vmatprep.subr.bf16.mxu0 0
    %166 = vmatpush1.bf16.msra.mxu0 0
    %167 = vmatprep.subr.bf16.mxu0 0
    %168 = vmatpush1.bf16.msra.mxu0 0
    %169 = vmatprep.subr.bf16.mxu0 0
    %170 = vmatpush1.bf16.msra.mxu0 0
    %171 = vmatprep.subr.bf16.mxu0 0
    %172 = vmatpush1.bf16.msra.mxu0 0
    %173 = vmatprep.subr.bf16.mxu0 0
    %174 = vmatpush1.bf16.msra.mxu0 0
    %175 = vmatprep.subr.bf16.mxu0 0
    %176 = vmatpush1.bf16.msra.mxu0 0
    %177 = vmatprep.subr.bf16.mxu0 0
    %178 = vmatpush1.bf16.msra.mxu0 0
    %179 = vmatprep.subr.bf16.mxu0 0
    %180 = vmatpush1.bf16.msra.mxu0 0
    %181 = vmatprep.subr.bf16.mxu0 0
    %182 = vmatpush1.bf16.msra.mxu0 0
    %183 = vmatprep.subr.bf16.mxu0 0
    %184 = vmatpush1.bf16.msra.mxu0 0
    %185 = vmatprep.subr.bf16.mxu0 0
    %186 = vmatpush1.bf16.msra.mxu0 0
    %187 = vmatprep.subr.bf16.mxu0 0
    %188 = vmatpush1.bf16.msra.mxu0 0
    %189 = vmatprep.mubr.bf16.mxu0 0
    %190 = vmatmul.mubr.bf16.gmra.mrb[0].mxu0 %v155
    %v191 = vpop.f32.mrb[0].mxu0
    %v192 = vadd.f32 %v139, %v191
    %v193 = vpop.f32.mrb[0].mxu0
    %v194 = vpop.f32.mrb[0].mxu0
    %v195 = vadd.f32 %v139, %v194
    %v196 = vpop.f32.mrb[0].mxu0
    %197 = vdwg.mxu0
    %v198 = vpack.c.bf16 %v195, %v192
    %v200 = vunpack.c.l.b16 %v198
    %v201 = vunpack.c.h.b16 %v198
    %v202 = vpack.c.b16 %v200, %v200
    %v203 = vpack.c.b16 %v201, %v201
    %vm206 = vcmask 257024
    %207 = vst.msk [vmem:[#allocation14] sm:$0xf] %vm206, %v202
    %208 = vst.msk [vmem:[#allocation14 + $0x4] sm:$0xf] %vm206, %v203
    %v209 = vld [vmem:[#allocation11] sm:$0x1]
    %v211 = vlaneseq
    %v212 = vshrl.u32 %v211, 7
    %v213 = vsub.s32 0, %v212
    %v214 = vrot.slane %v209, %v213
    %216 = vrot.lane.b32.xlu0 %v149, 96
    %v217 = vpop.permute.xlu0 %216
    %218 = vrot.lane.b32.xlu0 %v150, 96
    %v219 = vpop.permute.xlu0 %218
    %v223 = vsel %vm153, %v130, 0
    %225 = vmatprep.subr.bf16.mxu0 0
    %226 = vmatpush1.bf16.msra.mxu0 %v217
    %227 = vmatprep.subr.bf16.mxu0 0
    %228 = vmatpush1.bf16.msra.mxu0 %v219
    %229 = vmatprep.subr.bf16.mxu0 0
    %230 = vmatpush1.bf16.msra.mxu0 0
    %231 = vmatprep.subr.bf16.mxu0 0
    %232 = vmatpush1.bf16.msra.mxu0 0
    %233 = vmatprep.subr.bf16.mxu0 0
    %234 = vmatpush1.bf16.msra.mxu0 0
    %235 = vmatprep.subr.bf16.mxu0 0
    %236 = vmatpush1.bf16.msra.mxu0 0
    %237 = vmatprep.subr.bf16.mxu0 0
    %238 = vmatpush1.bf16.msra.mxu0 0
    %239 = vmatprep.subr.bf16.mxu0 0
    %240 = vmatpush1.bf16.msra.mxu0 0
    %241 = vmatprep.subr.bf16.mxu0 0
    %242 = vmatpush1.bf16.msra.mxu0 0
    %243 = vmatprep.subr.bf16.mxu0 0
    %244 = vmatpush1.bf16.msra.mxu0 0
    %245 = vmatprep.subr.bf16.mxu0 0
    %246 = vmatpush1.bf16.msra.mxu0 0
    %247 = vmatprep.subr.bf16.mxu0 0
    %248 = vmatpush1.bf16.msra.mxu0 0
    %249 = vmatprep.subr.bf16.mxu0 0
    %250 = vmatpush1.bf16.msra.mxu0 0
    %251 = vmatprep.subr.bf16.mxu0 0
    %252 = vmatpush1.bf16.msra.mxu0 0
    %253 = vmatprep.subr.bf16.mxu0 0
    %254 = vmatpush1.bf16.msra.mxu0 0
    %255 = vmatprep.subr.bf16.mxu0 0
    %256 = vmatpush1.bf16.msra.mxu0 0
    %257 = vmatprep.mubr.bf16.mxu0 0
    %258 = vmatmul.mubr.bf16.gmra.mrb[0].mxu0 %v223
    %v259 = vpop.f32.mrb[0].mxu0
    %v260 = vadd.f32 %v214, %v259
    %v261 = vpop.f32.mrb[0].mxu0
    %v262 = vpop.f32.mrb[0].mxu0
    %v263 = vadd.f32 %v214, %v262
    %v264 = vpop.f32.mrb[0].mxu0
    %265 = vdwg.mxu0
    %v266 = vpack.c.bf16 %v263, %v260
    %v268 = vunpack.c.l.b16 %v266
    %v269 = vunpack.c.h.b16 %v266
    %v270 = vpack.c.b16 %v268, %v268
    %v271 = vpack.c.b16 %v269, %v269
    %274 = vst.msk [vmem:[#allocation15] sm:$0xf] %vm206, %v270
    %275 = vst.msk [vmem:[#allocation15 + $0x4] sm:$0xf] %vm206, %v271
    %v276 = vld [vmem:[#allocation13] sm:$0x1]
    %v278 = vlaneseq
    %v279 = vshrl.u32 %v278, 7
    %v280 = vsub.s32 0, %v279
    %v281 = vrot.slane %v276, %v280
    %283 = vrot.lane.b32.xlu0 %v149, 64
    %v284 = vpop.permute.xlu0 %283
    %285 = vrot.lane.b32.xlu0 %v150, 64
    %v286 = vpop.permute.xlu0 %285
    %v290 = vsel %vm153, %v133, 0
    %292 = vmatprep.subr.bf16.mxu0 0
    %293 = vmatpush1.bf16.msra.mxu0 %v284
    %294 = vmatprep.subr.bf16.mxu0 0
    %295 = vmatpush1.bf16.msra.mxu0 %v286
    %296 = vmatprep.subr.bf16.mxu0 0
    %297 = vmatpush1.bf16.msra.mxu0 0
    %298 = vmatprep.subr.bf16.mxu0 0
    %299 = vmatpush1.bf16.msra.mxu0 0
    %300 = vmatprep.subr.bf16.mxu0 0
    %301 = vmatpush1.bf16.msra.mxu0 0
    %302 = vmatprep.subr.bf16.mxu0 0
    %303 = vmatpush1.bf16.msra.mxu0 0
    %304 = vmatprep.subr.bf16.mxu0 0
    %305 = vmatpush1.bf16.msra.mxu0 0
    %306 = vmatprep.subr.bf16.mxu0 0
    %307 = vmatpush1.bf16.msra.mxu0 0
    %308 = vmatprep.subr.bf16.mxu0 0
    %309 = vmatpush1.bf16.msra.mxu0 0
    %310 = vmatprep.subr.bf16.mxu0 0
    %311 = vmatpush1.bf16.msra.mxu0 0
    %312 = vmatprep.subr.bf16.mxu0 0
    %313 = vmatpush1.bf16.msra.mxu0 0
    %314 = vmatprep.subr.bf16.mxu0 0
    %315 = vmatpush1.bf16.msra.mxu0 0
    %316 = vmatprep.subr.bf16.mxu0 0
    %317 = vmatpush1.bf16.msra.mxu0 0
    %318 = vmatprep.subr.bf16.mxu0 0
    %319 = vmatpush1.bf16.msra.mxu0 0
    %320 = vmatprep.subr.bf16.mxu0 0
    %321 = vmatpush1.bf16.msra.mxu0 0
    %322 = vmatprep.subr.bf16.mxu0 0
    %323 = vmatpush1.bf16.msra.mxu0 0
    %324 = vmatprep.mubr.bf16.mxu0 0
    %325 = vmatmul.mubr.bf16.gmra.mrb[0].mxu0 %v290
    %v326 = vpop.f32.mrb[0].mxu0
    %v327 = vadd.f32 %v281, %v326
    %v328 = vpop.f32.mrb[0].mxu0
    %v329 = vpop.f32.mrb[0].mxu0
    %v330 = vadd.f32 %v281, %v329
    %v331 = vpop.f32.mrb[0].mxu0
    %332 = vdwg.mxu0
    %v333 = vpack.c.bf16 %v330, %v327
    %v335 = vunpack.c.l.b16 %v333
    %v336 = vunpack.c.h.b16 %v333
    %v337 = vpack.c.b16 %v335, %v335
    %v338 = vpack.c.b16 %v336, %v336
    %341 = vst.msk [vmem:[#allocation17] sm:$0xf] %vm206, %v337
    %342 = vst.msk [vmem:[#allocation17 + $0x4] sm:$0xf] %vm206, %v338
    // Predicated region
    $region58: #{tpu_custom_call.1} parent=1 // pred_check
      _
    $region59: #{tpu_custom_call.1} parent=1 // pred_check_branch
      %344 = sbr.rel (0) target = $region61
    $region60: #{tpu_custom_call.1} parent=1 // pred_region
      %s346 = ssub.s32 128, 128
      %347 = vsyncadd [#allocation4], %s346
      %s348 = sshll.u32 [#allocation14], 4
      %s349 = int_to_ptr.vmem [resolvable:$true] %s348
      %354 = dma.vmem_to_hbm [thread:$0]  %s349, 128, %s7, [#allocation4], 64, 64, 4
    $region61: #{tpu_custom_call.1} parent=1 // pred_fallthru
      _
    // Predicated region
    $region62: #{tpu_custom_call.1} parent=1 // pred_check
      _
    $region63: #{tpu_custom_call.1} parent=1 // pred_check_branch
      %356 = sbr.rel (0) target = $region65
    $region64: #{tpu_custom_call.1} parent=1 // pred_region
      %s358 = ssub.s32 128, 128
      %359 = vsyncadd [#allocation16], %s358
      %s360 = sshll.u32 [#allocation15], 4
      %s361 = int_to_ptr.vmem [resolvable:$true] %s360
      %366 = dma.vmem_to_hbm [thread:$0]  %s361, 128, %s8, [#allocation16], 64, 64, 4
    $region65: #{tpu_custom_call.1} parent=1 // pred_fallthru
      _
    // Predicated region
    $region66: #{tpu_custom_call.1} parent=1 // pred_check
      _
    $region67: #{tpu_custom_call.1} parent=1 // pred_check_branch
      %368 = sbr.rel (0) target = $region69
    $region68: #{tpu_custom_call.1} parent=1 // pred_region
      %s370 = ssub.s32 128, 128
      %371 = vsyncadd [#allocation16], %s370
      %s372 = sshll.u32 [#allocation17], 4
      %s373 = int_to_ptr.vmem [resolvable:$true] %s372
      %378 = dma.vmem_to_hbm [thread:$0]  %s373, 128, %s9, [#allocation16], 64, 64, 4
    $region69: #{tpu_custom_call.1} parent=1 // pred_fallthru
      _
    // Predicated region
    $region70: #{tpu_custom_call.1} parent=1 // pred_check
      _
    $region71: #{tpu_custom_call.1} parent=1 // pred_check_branch
      %380 = sbr.rel (0) target = $region73
    $region72: #{tpu_custom_call.1} parent=1 // pred_region
      %381 = dma.done [#allocation4], 128
    $region73: #{tpu_custom_call.1} parent=1 // pred_fallthru
      _
    // Predicated region
    $region74: #{tpu_custom_call.1} parent=1 // pred_check
      _
    $region75: #{tpu_custom_call.1} parent=1 // pred_check_branch
      %383 = sbr.rel (0) target = $region77
    $region76: #{tpu_custom_call.1} parent=1 // pred_region
      %384 = dma.done [#allocation16], 128
    $region77: #{tpu_custom_call.1} parent=1 // pred_fallthru
      _
    // Predicated region
    $region78: #{tpu_custom_call.1} parent=1 // pred_check
      _
    $region79: #{tpu_custom_call.1} parent=1 // pred_check_branch
      %386 = sbr.rel (0) target = $region81
    $region80: #{tpu_custom_call.1} parent=1 // pred_region
      %387 = dma.done [#allocation16], 128
    $region81: #{tpu_custom_call.1} parent=1 // pred_fallthru
      _
    %388 = vsyncpa [#allocation3], 1
    %389 = vsyncpa [#allocation6], 1
    %390 = vsyncpa [#allocation9], 1
    %391 = vsyncpa [#allocation12], 1
    %392 = vsyncpa [#allocation4], 1
    %393 = vsyncpa [#allocation16], 1

</llo_original>
